<compile_context>
chip_gen: v6e
topology: v6e:2x2x1
jax: 0.10.0
libtpu: 0.0.40
codegen_flags: <defaults>
</compile_context>

<pallas_src>
import functools

import jax
import jax.numpy as jnp
from jax.experimental import pallas as pl
from jax.experimental.pallas import tpu as pltpu


def _round_up(x, m):
    return ((x + m - 1) // m) * m


def _fused_head_kernel(z_ref, w_ref, b_ref, out_ref):
    # z: (TB, 64), w: (64, 3), b: (1, 3) -> out: (TB, 3)
    acc = jnp.dot(z_ref[...], w_ref[...], preferred_element_type=jnp.float32)
    out_ref[...] = (acc + b_ref[...]).astype(out_ref.dtype)


@functools.partial(jax.jit, static_argnames=("tile_b",))
def classification_head_pallas(z, w1, b1, w2, b2, *, tile_b=16384):
    """Fused classification head on the Pallas path.

    z : (B, 64) float32
    w1: (64, 16), b1: (1, 16), w2: (16, 3), b2: (1, 3)
       (weights stored as (in_features, out_features) == PyTorch weight.T)
    returns (B, 3) float32
    """
    B = z.shape[0]

    # Fuse the two Linears (no activation in between) in plain JAX; removes
    # the K=16/N=3 second MXU pass entirely. Tiny one-time cost.
    w = jnp.dot(w1, w2, preferred_element_type=jnp.float32)        # (64, 3)
    b = jnp.dot(b1, w2, preferred_element_type=jnp.float32) + b2   # (1, 3)

    # Batch tile selection:
    #   * multiple of 8 (f32 sublane granularity),
    #   * capped at tile_b (16384 rows => ~32 MiB of lane-padded, double-
    #     buffered pipeline VMEM; fits all of v5e/v6e/v7x with the explicit
    #     48 MiB scoped-VMEM limit below),
    #   * capped at ~B/4 so the grid has >=4 steps and "parallel" can shard
    #     the batch axis across v7x's two TensorCores.
    tb = min(tile_b, _round_up(pl.cdiv(B, 4), 8))
    tb = max(tb, 8)
    grid = pl.cdiv(B, tb)   # ragged last block handled by Pallas; no jnp.pad

    bytes_f32 = 4
    cost = pl.CostEstimate(
        flops=2 * B * 64 * 3,
        transcendentals=0,
        bytes_accessed=(B * 64 + B * 3 + 64 * 3 + 3) * bytes_f32,
    )

    out = pl.pallas_call(
        _fused_head_kernel,
        out_shape=jax.ShapeDtypeStruct((B, 3), jnp.float32),
        grid_spec=pl.GridSpec(
            grid=(grid,),
            in_specs=[
                pl.BlockSpec((tb, 64), lambda i: (i, 0)),   # z tile streams
                pl.BlockSpec((64, 3), lambda i: (0, 0)),    # fused W resident
                pl.BlockSpec((1, 3), lambda i: (0, 0)),     # fused b resident
            ],
            out_specs=pl.BlockSpec((tb, 3), lambda i: (i, 0)),
        ),
        compiler_params=pltpu.CompilerParams(
            dimension_semantics=("parallel",),        # megacore-shard batch
            vmem_limit_bytes=48 * 1024 * 1024,        # tb=16384 needs ~32 MiB
        ),
        cost_estimate=cost,
    )(z, w, b)

    return out


def classification_head(z, w1, b1, w2, b2, *, pallas_min_batch=8192):
    """Dispatcher: small batches (< a few tiles of HBM traffic) are better
    left to XLA's fused matmul; large, HBM-bandwidth-bound z streams take the
    Pallas path."""
    if z.shape[0] < pallas_min_batch:
        return (z @ w1 + b1) @ w2 + b2
    return classification_head_pallas(z, w1, b1, w2, b2)


def init_params(key):
    """Deterministic PyTorch-style (uniform +-1/sqrt(fan_in)) init."""
    k1, k2, k3, k4 = jax.random.split(key, 4)
    bound1 = 1.0 / jnp.sqrt(64.0)
    bound2 = 1.0 / jnp.sqrt(16.0)
    # stored as (in_features, out_features) == PyTorch weight transposed
    w1 = jax.random.uniform(k1, (64, 16), jnp.float32, -bound1, bound1)
    b1 = jax.random.uniform(k2, (1, 16), jnp.float32, -bound1, bound1)
    w2 = jax.random.uniform(k3, (16, 3), jnp.float32, -bound2, bound2)
    b2 = jax.random.uniform(k4, (1, 3), jnp.float32, -bound2, bound2)
    return w1, b1, w2, b2


if __name__ == "__main__":
    key = jax.random.PRNGKey(0)
    kz, kz2, kp = jax.random.split(key, 3)

    w1, b1, w2, b2 = init_params(kp)

    # Small, 8-aligned batch — exercises the Pallas path with 4 grid steps.
    B = 64
    z = jax.random.normal(kz, (B, 64), dtype=jnp.float32)
    out = classification_head_pallas(z, w1, b1, w2, b2)
    out = jax.block_until_ready(out)
    ref = (z @ w1 + b1) @ w2 + b2
    assert out.shape == (B, 3)
    assert jnp.allclose(out, ref, atol=1e-4, rtol=1e-4)

    # Ragged batch (not a multiple of 8 or of the tile) — exercises the
    # no-pad cdiv grid with a partial last block.
    B2 = 50
    z2 = jax.random.normal(kz2, (B2, 64), dtype=jnp.float32)
    out2 = classification_head_pallas(z2, w1, b1, w2, b2)
    out2 = jax.block_until_ready(out2)
    ref2 = (z2 @ w1 + b1) @ w2 + b2
    assert out2.shape == (B2, 3)
    assert jnp.allclose(out2, ref2, atol=1e-4, rtol=1e-4)

    print("KERNEL_OK")
</pallas_src>

<mosaic_0001>
module attributes {stable_mosaic.version = 11 : i64} {
  func.func @_fused_head_kernel(%arg0: i32, %arg1: memref<16x64xf32, #tpu.memory_space<vmem>>, %arg2: memref<64x3xf32, #tpu.memory_space<vmem>>, %arg3: memref<1x3xf32, #tpu.memory_space<vmem>>, %arg4: memref<16x3xf32, #tpu.memory_space<vmem>>) attributes {dimension_semantics = [#tpu.dimension_semantics<parallel>], iteration_bounds = array<i64: 4>, scalar_prefetch = 0 : i64, scratch_operands = 0 : i64, tpu.core_type = #tpu.core_type<tc>, window_params = [{transform_indices = @transform_0, window_bounds = array<i64: 16, 64>}, {pipeline_mode = #tpu.pipeline_mode<synchronous>, transform_indices = @transform_1, window_bounds = array<i64: 64, 3>}, {pipeline_mode = #tpu.pipeline_mode<synchronous>, transform_indices = @transform_2, window_bounds = array<i64: 1, 3>}, {transform_indices = @transform_3, window_bounds = array<i64: 16, 3>}]} {
    %c0 = arith.constant 0 : index
    %c0_0 = arith.constant 0 : index
    %0 = vector.load %arg1[%c0, %c0_0] : memref<16x64xf32, #tpu.memory_space<vmem>>, vector<16x64xf32>
    %c0_1 = arith.constant 0 : index
    %c0_2 = arith.constant 0 : index
    %1 = vector.load %arg2[%c0_1, %c0_2] : memref<64x3xf32, #tpu.memory_space<vmem>>, vector<64x3xf32>
    %cst = arith.constant dense<0.000000e+00> : vector<16x3xf32>
    %2 = tpu.matmul %0, %1, %cst {dimension_numbers = #tpu.dot_dimension_numbers<[1], [0], [0], [1], [0, 0, 1, 1], [], []>} : vector<16x64xf32>, vector<64x3xf32>, vector<16x3xf32> -> vector<16x3xf32>
    %c0_3 = arith.constant 0 : index
    %c0_4 = arith.constant 0 : index
    %3 = vector.load %arg3[%c0_3, %c0_4] : memref<1x3xf32, #tpu.memory_space<vmem>>, vector<1x3xf32>
    %4 = vector.broadcast %3 : vector<1x3xf32> to vector<16x3xf32>
    %5 = arith.addf %2, %4 : vector<16x3xf32>
    %c0_5 = arith.constant 0 : index
    %c0_6 = arith.constant 0 : index
    %6 = vector.load %arg4[%c0_5, %c0_6] : memref<16x3xf32, #tpu.memory_space<vmem>>, vector<16x3xf32>
    tpu.vector_store %arg4[%c0_5, %c0_6], %5 {strides = array<i32>} : memref<16x3xf32, #tpu.memory_space<vmem>>, vector<16x3xf32>,
    return
  }
  func.func @transform_0(%arg0: i32) -> (i32, i32) {
    %c0_i32 = arith.constant 0 : i32
    %c0_i32_0 = arith.constant 0 : i32
    return %arg0, %c0_i32 : i32, i32
  }
  func.func @transform_1(%arg0: i32) -> (i32, i32) {
    %c0_i32 = arith.constant 0 : i32
    %c0_i32_0 = arith.constant 0 : i32
    %c0_i32_1 = arith.constant 0 : i32
    return %c0_i32, %c0_i32_0 : i32, i32
  }
  func.func @transform_2(%arg0: i32) -> (i32, i32) {
    %c0_i32 = arith.constant 0 : i32
    %c0_i32_0 = arith.constant 0 : i32
    %c0_i32_1 = arith.constant 0 : i32
    return %c0_i32, %c0_i32_0 : i32, i32
  }
  func.func @transform_3(%arg0: i32) -> (i32, i32) {
    %c0_i32 = arith.constant 0 : i32
    %c0_i32_0 = arith.constant 0 : i32
    return %arg0, %c0_i32 : i32, i32
  }
}

</mosaic_0001>

<llo_original>
// kernel: classification_head_pallas.1
$region0: #{classification_head_pallas.1}
  #allocation0 [shape = 'u32[]', space=smem, size = 0x4, offset = 0x4, fixed_abs, tag = 'smem constant byte address 0x4 - core index']
  #allocation1 [shape = 'u32[144,128]{1,0:T(1,128)}', space=vmem, size = 0x12000, scoped, tag = 'internal scratch']
  %s0 = inlined_call_operand.vmem [shape: f32[64,64], index: 0, kind: input, shape index: {}]
  %s1 = inlined_call_operand.vmem [shape: f32[64,3], index: 1, kind: input, shape index: {}]
  %s2 = inlined_call_operand.vmem [shape: f32[1,3], index: 2, kind: input, shape index: {}]
  %s3 = inlined_call_operand.vmem [shape: f32[64,3], index: 3, kind: output, shape index: {}]
  %s4 = sld [smem:[#allocation0]]
  $region45: #{classification_head_pallas.1} parent=0
    _
  %s6 = ssub.s32 1, %s4
  %s7 = scalar_select 0, %s6, %s4
  loop: start=0, step=1, limit=6
  $region2: #{classification_head_pallas.1} parent=0 // loop_pre_header
    _
  $region3: #{classification_head_pallas.1} parent=0 // loop_header
    %s9 = sphi 0, %s13
    %p10 = scmp.ge.s32.totalorder %s9, 6
    %s19 = sphi 0, %s21
    %s22 = sphi 0, %s19
    %s23 = sphi 0, %s22
    %s39 = sphi 0, %s23
    %s43 = sphi 0, %s43
    %s45 = sphi 0, %s43
    %s46 = sphi 0, %s45
    %s60 = sphi 0, %s46
    %s64 = sphi 0, %s64
    %s66 = sphi 0, %s64
    %s67 = sphi 0, %s66
    %s81 = sphi 0, %s67
    %s87 = sphi 0, %s89
    %s90 = sphi 0, %s87
    %s91 = sphi 0, %s90
    %s107 = sphi 0, %s91
  $region4: #{classification_head_pallas.1} parent=0 // loop_header_branch
    %12 = sbr.rel (%p10) target = $region8
  $region5: #{classification_head_pallas.1} parent=0 // loop_body
    %s14 = ssub.s32 %s9, 1
    %s15 = ssub.s32 %s9, 2
    %s16 = sadd.s32 %s9, 1
    %s17 = ssub.s32 %s9, %s16
    %p18 = scmp.eq.s32.totalorder %s17, 0
    %s20 = sadd.s32 %s19, 1
    %s21 = scalar_select %p18, %s19, %s20
    %p24 = pneg %p18
    %p25 = scmp.eq.s32.totalorder %s9, 3
    %p26 = por %p24, %p25
    %p27 = scmp.ne.s32.totalorder %s19, %s22
    %p28 = scmp.eq.s32.totalorder %s9, 0
    %p29 = por %p27, %p28
    %p30 = scmp.ne.s32.totalorder %s19, %s22
    %p31 = scmp.eq.s32.totalorder %s14, 3
    %p32 = por %p30, %p31
    %p33 = scmp.ne.s32.totalorder %s22, %s23
    %p34 = scmp.eq.s32.totalorder %s14, 0
    %p35 = por %p33, %p34
    %p36 = scmp.ne.s32.totalorder %s22, %s23
    %p37 = scmp.eq.s32.totalorder %s15, 3
    %p38 = por %p36, %p37
    %p40 = scmp.ne.s32.totalorder %s23, %s39
    %p41 = scmp.eq.s32.totalorder %s15, 0
    %p42 = por %p40, %p41
    %s44 = sadd.s32 %s43, 1
    %p47 = scmp.eq.s32.totalorder %s9, 3
    %p48 = scmp.ne.s32.totalorder %s43, %s45
    %p49 = scmp.eq.s32.totalorder %s9, 0
    %p50 = por %p48, %p49
    %p51 = scmp.ne.s32.totalorder %s43, %s45
    %p52 = scmp.eq.s32.totalorder %s14, 3
    %p53 = por %p51, %p52
    %p54 = scmp.ne.s32.totalorder %s45, %s46
    %p55 = scmp.eq.s32.totalorder %s14, 0
    %p56 = por %p54, %p55
    %p57 = scmp.ne.s32.totalorder %s45, %s46
    %p58 = scmp.eq.s32.totalorder %s15, 3
    %p59 = por %p57, %p58
    %p61 = scmp.ne.s32.totalorder %s46, %s60
    %p62 = scmp.eq.s32.totalorder %s15, 0
    %p63 = por %p61, %p62
    %s65 = sadd.s32 %s64, 1
    %p68 = scmp.eq.s32.totalorder %s9, 3
    %p69 = scmp.ne.s32.totalorder %s64, %s66
    %p70 = scmp.eq.s32.totalorder %s9, 0
    %p71 = por %p69, %p70
    %p72 = scmp.ne.s32.totalorder %s64, %s66
    %p73 = scmp.eq.s32.totalorder %s14, 3
    %p74 = por %p72, %p73
    %p75 = scmp.ne.s32.totalorder %s66, %s67
    %p76 = scmp.eq.s32.totalorder %s14, 0
    %p77 = por %p75, %p76
    %p78 = scmp.ne.s32.totalorder %s66, %s67
    %p79 = scmp.eq.s32.totalorder %s15, 3
    %p80 = por %p78, %p79
    %p82 = scmp.ne.s32.totalorder %s67, %s81
    %p83 = scmp.eq.s32.totalorder %s15, 0
    %p84 = por %p82, %p83
    %s85 = ssub.s32 %s9, %s16
    %p86 = scmp.eq.s32.totalorder %s85, 0
    %s88 = sadd.s32 %s87, 1
    %s89 = scalar_select %p86, %s87, %s88
    %p92 = pneg %p86
    %p93 = scmp.eq.s32.totalorder %s9, 3
    %p94 = por %p92, %p93
    %p95 = scmp.ne.s32.totalorder %s87, %s90
    %p96 = scmp.eq.s32.totalorder %s9, 0
    %p97 = por %p95, %p96
    %p98 = scmp.ne.s32.totalorder %s87, %s90
    %p99 = scmp.eq.s32.totalorder %s14, 3
    %p100 = por %p98, %p99
    %p101 = scmp.ne.s32.totalorder %s90, %s91
    %p102 = scmp.eq.s32.totalorder %s14, 0
    %p103 = por %p101, %p102
    %p104 = scmp.ne.s32.totalorder %s90, %s91
    %p105 = scmp.eq.s32.totalorder %s15, 3
    %p106 = por %p104, %p105
    %p108 = scmp.ne.s32.totalorder %s91, %s107
    %p109 = scmp.eq.s32.totalorder %s15, 0
    %p110 = por %p108, %p109
    %p111 = scmp.le.s32.totalorder 1, %s9
    %p112 = scmp.lt.s32.totalorder %s9, 5
    %p113 = pnand %p111, %p112
    %p114 = pneg %p113
    // Predicated region
    $region9: #{classification_head_pallas.1} parent=5 // pred_check
      _
    $region10: #{classification_head_pallas.1} parent=5 // pred_check_branch
      %116 = sbr.rel (%p113) target = $region12
    $region11: #{classification_head_pallas.1} parent=5 // pred_region
      %s117 = ssub.s32 %s9, 1
      // Predicated region
      $region13: #{classification_head_pallas.1} parent=11 // pred_check
        %p118 = pneg %p56
      $region14: #{classification_head_pallas.1} parent=11 // pred_check_branch
        %120 = sbr.rel (%p118) target = $region16
      $region15: #{classification_head_pallas.1} parent=11 // pred_region
        _
      $region16: #{classification_head_pallas.1} parent=11 // pred_fallthru
        _
      // Predicated region
      $region17: #{classification_head_pallas.1} parent=11 // pred_check
        %p121 = pneg %p77
      $region18: #{classification_head_pallas.1} parent=11 // pred_check_branch
        %123 = sbr.rel (%p121) target = $region20
      $region19: #{classification_head_pallas.1} parent=11 // pred_region
        _
      $region20: #{classification_head_pallas.1} parent=11 // pred_fallthru
        _
    $region12: #{classification_head_pallas.1} parent=5 // pred_fallthru
      _
    %p124 = scmp.lt.s32.totalorder %s9, 4
    // Predicated region
    $region21: #{classification_head_pallas.1} parent=5 // pred_check
      %p125 = pneg %p124
    $region22: #{classification_head_pallas.1} parent=5 // pred_check_branch
      %127 = sbr.rel (%p125) target = $region24
    $region23: #{classification_head_pallas.1} parent=5 // pred_region
      // Predicated region
      $region25: #{classification_head_pallas.1} parent=23 // pred_check
        %p128 = pneg %p29
      $region26: #{classification_head_pallas.1} parent=23 // pred_check_branch
        %130 = sbr.rel (%p128) target = $region28
      $region27: #{classification_head_pallas.1} parent=23 // pred_region
        %s131 = smul.u32 2, %s9
        %p132 = scmp.lt.s32.totalorder %s131, 7
        %s133 = scalar_select %p132, %s131, 7
        %s134 = smul.addr %s133, 8
        %s135 = scalar_lea.vmem %s0, %s134
        %s136 = smul.u32 2, %s9
      $region28: #{classification_head_pallas.1} parent=23 // pred_fallthru
        _
    $region24: #{classification_head_pallas.1} parent=5 // pred_fallthru
      _
    %p137 = scmp.le.s32.totalorder 1, %s9
    %p138 = scmp.lt.s32.totalorder %s9, 5
    %p139 = pnand %p137, %p138
    %p140 = pneg %p139
    // Predicated region
    $region29: #{classification_head_pallas.1} parent=5 // pred_check
      _
    $region30: #{classification_head_pallas.1} parent=5 // pred_check_branch
      %142 = sbr.rel (%p139) target = $region32
    $region31: #{classification_head_pallas.1} parent=5 // pred_region
      %s143 = ssub.s32 %s9, 1
      %s144 = smul.u32 2, %s14
      %p145 = scmp.lt.s32.totalorder %s144, 7
      %s146 = scalar_select %p145, %s144, 7
      %s147 = smul.addr %s146, 8
      %s148 = scalar_lea.vmem %s0, %s147
      %p149 = pneg %p35
      %p150 = pneg %p32
      %p151 = pneg %p56
      %p152 = pneg %p53
      %p153 = pneg %p77
      %p154 = pneg %p74
      %p155 = pneg %p103
      %p156 = pneg %p100
      %s157 = smul.u32 2, %s14
      %p158 = scmp.lt.s32.totalorder %s157, 7
      %s159 = scalar_select %p158, %s157, 7
      %s160 = smul.addr %s159, 8
      %s161 = scalar_lea.vmem %s3, %s160
      %s162 = smul.u32 2, %s14
      %p163 = scmp.lt.s32.totalorder %s162, 7
      %s164 = scalar_select %p163, %s162, 7
      %s165 = smul.addr %s164, 8
      %s166 = scalar_lea.vmem %s0, %s165
      %s167 = smul.u32 2, %s14
      %s168 = smul.u32 2, %s14
      %p169 = scmp.lt.s32.totalorder %s168, 7
      %s170 = scalar_select %p169, %s168, 7
      %s171 = smul.addr %s170, 8
      %s172 = scalar_lea.vmem %s3, %s171
      %s173 = smul.u32 2, %s14
      %v174 = vld [vmem:[%s166] sm:$0xff]
      %v175 = vld [vmem:[%s166 + $0x8] sm:$0xff]
      %v176 = vld [vmem:[%s1] sm:$0xff]
      %v177 = vld [vmem:[%s1 + $0x8] sm:$0xff]
      %v178 = vld [vmem:[%s1 + $0x10] sm:$0xff]
      %v179 = vld [vmem:[%s1 + $0x18] sm:$0xff]
      %v180 = vld [vmem:[%s1 + $0x20] sm:$0xff]
      %v181 = vld [vmem:[%s1 + $0x28] sm:$0xff]
      %v182 = vld [vmem:[%s1 + $0x30] sm:$0xff]
      %v183 = vld [vmem:[%s1 + $0x38] sm:$0xff]
      %v184 = vld [vmem:[%s2] sm:$0x1]
      %v186 = vlaneseq
      %v187 = vshrl.u32 %v186, 7
      %v188 = vsub.s32 0, %v187
      %v189 = vrot.slane %v184, %v188
      %vm191 = vcmask 523264
      %v193 = vsel %vm191, %v174, 0
      %v196 = vsel %vm191, %v175, 0
      %198 = vmatprep.subr.mxu0 0.0
      %199 = vmatpush1.msra.mxu0 0.0
      %200 = vmatprep.subr.mxu0 0.0
      %201 = vmatpush1.msra.mxu0 0.0
      %202 = vmatprep.subr.mxu0 0.0
      %203 = vmatpush1.msra.mxu0 0.0
      %204 = vmatprep.subr.mxu0 0.0
      %205 = vmatpush1.msra.mxu0 0.0
      %206 = vmatprep.subr.mxu0 0.0
      %207 = vmatpush1.msra.mxu0 0.0
      %208 = vmatprep.subr.mxu0 0.0
      %209 = vmatpush1.msra.mxu0 0.0
      %210 = vmatprep.subr.mxu0 0.0
      %211 = vmatpush1.msra.mxu0 0.0
      %212 = vmatprep.subr.mxu0 0.0
      %213 = vmatpush1.msra.mxu0 0.0
      %214 = vmatprep.subr.mxu0 0.0
      %215 = vmatpush1.msra.mxu0 %v183
      %216 = vmatprep.subr.mxu0 0.0
      %217 = vmatpush1.msra.mxu0 %v182
      %218 = vmatprep.subr.mxu0 0.0
      %219 = vmatpush1.msra.mxu0 %v181
      %220 = vmatprep.subr.mxu0 0.0
      %221 = vmatpush1.msra.mxu0 %v180
      %222 = vmatprep.subr.mxu0 0.0
      %223 = vmatpush1.msra.mxu0 %v179
      %224 = vmatprep.subr.mxu0 0.0
      %225 = vmatpush1.msra.mxu0 %v178
      %226 = vmatprep.subr.mxu0 0.0
      %227 = vmatpush1.msra.mxu0 %v177
      %228 = vmatprep.subr.mxu0 0.0
      %229 = vmatpush1.msra.mxu0 %v176
      %230 = vmatprep.subr.mxu0 0.0
      %231 = vmatpush2.msra.mxu0 0.0
      %232 = vmatprep.subr.mxu0 0.0
      %233 = vmatpush2.msra.mxu0 0.0
      %234 = vmatprep.subr.mxu0 0.0
      %235 = vmatpush2.msra.mxu0 0.0
      %236 = vmatprep.subr.mxu0 0.0
      %237 = vmatpush2.msra.mxu0 0.0
      %238 = vmatprep.subr.mxu0 0.0
      %239 = vmatpush2.msra.mxu0 0.0
      %240 = vmatprep.subr.mxu0 0.0
      %241 = vmatpush2.msra.mxu0 0.0
      %242 = vmatprep.subr.mxu0 0.0
      %243 = vmatpush2.msra.mxu0 0.0
      %244 = vmatprep.subr.mxu0 0.0
      %245 = vmatpush2.msra.mxu0 0.0
      %246 = vmatprep.subr.mxu0 0.0
      %247 = vmatpush2.msra.mxu0 0.0
      %248 = vmatprep.subr.mxu0 0.0
      %249 = vmatpush2.msra.mxu0 0.0
      %250 = vmatprep.subr.mxu0 0.0
      %251 = vmatpush2.msra.mxu0 0.0
      %252 = vmatprep.subr.mxu0 0.0
      %253 = vmatpush2.msra.mxu0 0.0
      %254 = vmatprep.subr.mxu0 0.0
      %255 = vmatpush2.msra.mxu0 0.0
      %256 = vmatprep.subr.mxu0 0.0
      %257 = vmatpush2.msra.mxu0 0.0
      %258 = vmatprep.subr.mxu0 0.0
      %259 = vmatpush2.msra.mxu0 0.0
      %260 = vmatprep.subr.mxu0 0.0
      %261 = vmatpush2.msra.mxu0 0.0
      %262 = vmatprep.mubr.f32.mxu0 0.0
      %263 = vmatmul.mubr.f32.gmra.mxu0 %v193
      %v264 = vpop.f32.mrf.mxu0
      %v265 = vadd.f32 %v189, %v264
      %v266 = vpop.f32.mrf.mxu0
      %267 = vmatprep.mubr.f32.mxu0 0.0
      %268 = vmatmul.mubr.f32.gmra.mxu0 %v196
      %v269 = vpop.f32.mrf.mxu0
      %v270 = vadd.f32 %v189, %v269
      %v271 = vpop.f32.mrf.mxu0
      %272 = vdwg.mxu0
      %vm273 = vcmask 23552
      %274 = vst.msk [vmem:[%s172] sm:$0xff] %vm273, %v265
      %275 = vst.msk [vmem:[%s172 + $0x8] sm:$0xff] %vm273, %v270
      %s276 = smul.u32 2, %s14
      %p277 = scmp.lt.s32.totalorder %s276, 7
      %s278 = scalar_select %p277, %s276, 7
      %s279 = smul.addr %s278, 8
      %s280 = scalar_lea.vmem %s3, %s279
      // Predicated region
      $region33: #{classification_head_pallas.1} parent=31 // pred_check
        %p281 = pneg %p100
      $region34: #{classification_head_pallas.1} parent=31 // pred_check_branch
        %283 = sbr.rel (%p281) target = $region36
      $region35: #{classification_head_pallas.1} parent=31 // pred_region
        %s284 = smul.u32 2, %s14
      $region36: #{classification_head_pallas.1} parent=31 // pred_fallthru
        _
    $region32: #{classification_head_pallas.1} parent=5 // pred_fallthru
      _
    %p285 = scmp.le.s32.totalorder 2, %s9
    // Predicated region
    $region37: #{classification_head_pallas.1} parent=5 // pred_check
      %p286 = pneg %p285
    $region38: #{classification_head_pallas.1} parent=5 // pred_check_branch
      %288 = sbr.rel (%p286) target = $region40
    $region39: #{classification_head_pallas.1} parent=5 // pred_region
      %s289 = ssub.s32 %s9, 2
      // Predicated region
      $region41: #{classification_head_pallas.1} parent=39 // pred_check
        %p290 = pneg %p106
      $region42: #{classification_head_pallas.1} parent=39 // pred_check_branch
        %292 = sbr.rel (%p290) target = $region44
      $region43: #{classification_head_pallas.1} parent=39 // pred_region
        %s293 = smul.u32 2, %s15
        %p294 = scmp.lt.s32.totalorder %s293, 7
        %s295 = scalar_select %p294, %s293, 7
        %s296 = smul.addr %s295, 8
        %s297 = scalar_lea.vmem %s3, %s296
      $region44: #{classification_head_pallas.1} parent=39 // pred_fallthru
        _
    $region40: #{classification_head_pallas.1} parent=5 // pred_fallthru
      _
  $region6: #{classification_head_pallas.1} parent=0 // loop_footer
    %s13 = sadd.s32 1, %s9
  $region7: #{classification_head_pallas.1} parent=0 // loop_footer_branch
    %8 = sbr.rel target = $region3
  $region8: #{classification_head_pallas.1} parent=0 // loop_exit
    _

</llo_original>
